<compile_context>
chip_gen: v5e
topology: v5e:2x2
jax: 0.10.0
libtpu: 0.0.40
codegen_flags: <defaults>
</compile_context>

<pallas_src>
import functools

import jax
import jax.numpy as jnp
from jax.experimental import pallas as pl
from jax.experimental.pallas import tpu as pltpu


# ---------------------------------------------------------------------------
# Kernel 1: fused QKV projection — one (tokens, C) @ (C, 3C) matmul per tile.
# ---------------------------------------------------------------------------
def _qkv_proj_kernel(x_ref, w_ref, b_ref, qkv_ref):
    y = jnp.dot(x_ref[...], w_ref[...],
                preferred_element_type=jnp.float32) + b_ref[...]
    qkv_ref[...] = y.astype(qkv_ref.dtype)


def _qkv_projection(x2d, wqkv_t, bqkv, tp, vmem_limit):
    T, C = x2d.shape
    C3 = wqkv_t.shape[1]
    return pl.pallas_call(
        _qkv_proj_kernel,
        out_shape=jax.ShapeDtypeStruct((T, C3), jnp.bfloat16),
        grid_spec=pltpu.PrefetchScalarGridSpec(
            num_scalar_prefetch=0,
            grid=(T // tp,),
            in_specs=[
                pl.BlockSpec((tp, C), lambda i: (i, 0)),
                pl.BlockSpec((C, C3), lambda i: (0, 0)),   # grid-invariant
                pl.BlockSpec((1, C3), lambda i: (0, 0)),   # grid-invariant
            ],
            out_specs=pl.BlockSpec((tp, C3), lambda i: (i, 0))),
        compiler_params=pltpu.CompilerParams(
            dimension_semantics=("parallel",),
            vmem_limit_bytes=vmem_limit),
    )(x2d, wqkv_t, bqkv)


# ---------------------------------------------------------------------------
# Kernel 2: flash attention over pre-projected head-major Q/K/V, with the
# output projection fused into the epilogue.
# ---------------------------------------------------------------------------
def _flash_mha_kernel(q_ref, k_ref, v_ref, wo_ref, bo_ref, o_ref,
                      m_scr, l_scr, acc_scr, ao_scr,
                      *, num_heads, head_dim):
    kv_step = pl.program_id(1)

    @pl.when(kv_step == 0)
    def _init():
        m_scr[...] = jnp.full_like(m_scr, -jnp.inf)
        l_scr[...] = jnp.zeros_like(l_scr)
        acc_scr[...] = jnp.zeros_like(acc_scr)

    q = q_ref[0]                       # (heads, tq,  hd) bf16, pre-scaled
    k = k_ref[0]                       # (heads, tkv, hd) bf16
    v = v_ref[0]                       # (heads, tkv, hd) bf16

    # Batched per-head contraction: no lane slicing, one MXU stream.
    s = jnp.einsum('hqd,hkd->hqk', q, k,
                   preferred_element_type=jnp.float32)        # (heads, tq, tkv)
    m_prev = m_scr[...]                                       # (heads, tq, 1)
    m_new = jnp.maximum(m_prev, jnp.max(s, axis=-1, keepdims=True))
    alpha = jnp.exp(m_prev - m_new)
    p = jnp.exp(s - m_new)                                    # f32
    l_scr[...] = alpha * l_scr[...] + jnp.sum(p, axis=-1, keepdims=True)
    acc_scr[...] = alpha * acc_scr[...] + jnp.einsum(
        'hqk,hkd->hqd', p.astype(jnp.bfloat16), v,
        preferred_element_type=jnp.float32)
    m_scr[...] = m_new

    @pl.when(kv_step == pl.num_programs(1) - 1)
    def _finalize():
        hd = head_dim
        # Assemble the normalized heads into one lane-dense (tq, C) buffer
        # (per-head stores happen only once per query tile, in the epilogue).
        for h in range(num_heads):
            ao_scr[:, h * hd:(h + 1) * hd] = acc_scr[h] / l_scr[h]
        # Single full-depth output-projection matmul: (tq, C) @ (C, C).
        out = jnp.dot(ao_scr[...].astype(jnp.bfloat16), wo_ref[...],
                      preferred_element_type=jnp.float32) + bo_ref[...]
        o_ref[0] = out.astype(o_ref.dtype)


# ---------------------------------------------------------------------------
# Tiling / VMEM helpers
# ---------------------------------------------------------------------------
def _vmem_capacity_bytes():
    try:
        return int(pltpu.get_tpu_info().vmem_capacity_bytes)
    except Exception:
        return 64 * 2 ** 20            # conservative (v7x-sized) fallback


def _pick_tile(n, target):
    """Largest divisor of n <= target, preferring 128-multiples (lane density),
    then 8-multiples (sublane alignment); n itself if n <= target."""
    if n <= target:
        return n
    for step in (128, 8):
        t = (target // step) * step
        while t >= step:
            if n % t == 0:
                return t
            t -= step
    # TODO(synk): pad the sequence to a tile multiple and mask the tail instead
    # of refusing awkward H*W values.
    raise ValueError(
        f"sequence length {n} has no multiple-of-8 tile divisor <= {target}")


def _flash_vmem_limit(tq, tkv, C, num_heads, hd, capacity):
    pad = lambda x: -(-x // 128) * 128
    bf16, f32 = 2, 4
    hdp, Cp = pad(hd), pad(C)
    # Double-buffered streamed blocks (head-major q/k/v, bf16 output tile).
    tiles = 2 * (num_heads * tq * hdp * bf16
                 + 2 * num_heads * tkv * hdp * bf16
                 + tq * Cp * bf16)
    # Grid-invariant output-projection weight / bias (small; double-buffered).
    weights = 2 * (C * Cp * bf16 + 8 * Cp * f32)
    # Scratch: m / l (lane-padded), PV accumulator, assembled (tq, C) buffer.
    scratch = (2 * num_heads * tq * 128 * f32
               + num_heads * tq * hdp * f32
               + tq * Cp * f32)
    # Live per-step intermediates: a few copies of the f32 score/prob tiles.
    live = 3 * num_heads * tq * tkv * f32
    est = tiles + weights + scratch + live
    return int(min(max(2 * est, 16 * 2 ** 20), (capacity * 3) // 4))


# ---------------------------------------------------------------------------
# Wrapper: NCHW in, NCHW out (matches the PyTorch module's forward).
# ---------------------------------------------------------------------------
def self_attention_pallas(x_nchw, params, num_heads, *,
                          q_tile=None, kv_tile=None, proj_tile=512):
    B, C, H, W = x_nchw.shape
    N = H * W
    assert C % num_heads == 0, "in_channels must be divisible by num_heads"
    hd = C // num_heads
    wq, bq, wk, bk, wv, bv, wo, bo = params        # W: (C_out, C_in), b: (C,)
    scale = 1.0 / (hd ** 0.5)

    capacity = _vmem_capacity_bytes()
    if q_tile is None:
        q_tile = 256
    if kv_tile is None:
        # 128-MiB parts (v5e/v6e) can afford larger kv tiles than 64-MiB v7x.
        kv_tile = 1024 if capacity >= 100 * 2 ** 20 else 512

    # --- 1. Fused QKV projection: x @ [Wq^T*scale | Wk^T | Wv^T] + b --------
    x_seq = jnp.transpose(x_nchw.reshape(B, C, N), (0, 2, 1))   # (B, N, C) f32
    x2d = x_seq.reshape(B * N, C).astype(jnp.bfloat16)
    wqkv_t = jnp.concatenate([wq.T * scale, wk.T, wv.T],
                             axis=1).astype(jnp.bfloat16)        # (C, 3C)
    bqkv = jnp.concatenate([bq * scale, bk, bv]).reshape(1, 3 * C)
    bqkv = bqkv.astype(jnp.float32)
    tp = _pick_tile(B * N, proj_tile)
    proj_vmem = int(min(max(4 * (tp * 4 * C * 2 + 3 * C * C * 2), 16 * 2 ** 20),
                        (capacity * 3) // 4))
    qkv = _qkv_projection(x2d, wqkv_t, bqkv, tp, proj_vmem)      # (B*N, 3C) bf16

    # --- 2. Head-major Q/K/V: (B, heads, N, hd), bf16 ------------------------
    qkv = qkv.reshape(B, N, 3, num_heads, hd)
    qkv = jnp.transpose(qkv, (2, 0, 3, 1, 4))                    # (3, B, h, N, hd)
    q_hm, k_hm, v_hm = qkv[0], qkv[1], qkv[2]
    # TODO(synk): for hd < 128 the head-major VMEM tiles are lane-padded; an
    # hd-packed layout would reclaim that padding.

    # --- 3. Flash attention + fused output projection ------------------------
    tq = _pick_tile(N, q_tile)
    tkv = _pick_tile(N, kv_tile)
    n_q = N // tq
    grid = (B * n_q, N // tkv)          # merged (batch, q-tile) parallel axis

    wo_t = wo.T.astype(jnp.bfloat16)                             # (C, C)
    bo_r = bo.reshape(1, C).astype(jnp.float32)

    kernel = functools.partial(_flash_mha_kernel,
                               num_heads=num_heads, head_dim=hd)

    q_map = lambda m, ki: (m // n_q, 0, m % n_q, 0)
    kv_map = lambda m, ki: (m // n_q, 0, ki, 0)
    o_map = lambda m, ki: (m // n_q, m % n_q, 0)
    const = lambda m, ki: (0, 0)

    out_seq = pl.pallas_call(
        kernel,
        out_shape=jax.ShapeDtypeStruct((B, N, C), jnp.bfloat16),
        grid_spec=pltpu.PrefetchScalarGridSpec(
            num_scalar_prefetch=0,
            grid=grid,
            in_specs=[
                pl.BlockSpec((1, num_heads, tq, hd), q_map),     # Q (pre-scaled)
                pl.BlockSpec((1, num_heads, tkv, hd), kv_map),   # K
                pl.BlockSpec((1, num_heads, tkv, hd), kv_map),   # V
                pl.BlockSpec((C, C), const),                     # Wo^T
                pl.BlockSpec((1, C), const),                     # bo
            ],
            out_specs=pl.BlockSpec((1, tq, C), o_map),
            scratch_shapes=[
                pltpu.VMEM((num_heads, tq, 1), jnp.float32),     # running max m
                pltpu.VMEM((num_heads, tq, 1), jnp.float32),     # running denom l
                pltpu.VMEM((num_heads, tq, hd), jnp.float32),    # PV accumulator
                pltpu.VMEM((tq, C), jnp.float32),                # assembled heads
            ]),
        compiler_params=pltpu.CompilerParams(
            dimension_semantics=("parallel", "arbitrary"),
            vmem_limit_bytes=_flash_vmem_limit(tq, tkv, C, num_heads, hd,
                                               capacity)),
    )(q_hm, k_hm, v_hm, wo_t, bo_r)

    # --- 4. Residual with the ORIGINAL f32 input (wrapper-side) --------------
    out_nchw = jnp.transpose(out_seq.astype(jnp.float32),
                             (0, 2, 1)).reshape(B, C, H, W)
    return x_nchw + out_nchw


# ---------------------------------------------------------------------------
# Plain-JAX f32 mirror of the PyTorch forward, for verification.
# ---------------------------------------------------------------------------
def _reference(x_nchw, params, num_heads):
    B, C, H, W = x_nchw.shape
    N = H * W
    hd = C // num_heads
    wq, bq, wk, bk, wv, bv, wo, bo = params

    def conv1x1(x, w, b):
        return jnp.einsum('oc,bcn->bon', w, x) + b[None, :, None]

    xf = x_nchw.reshape(B, C, N)
    q = conv1x1(xf, wq, bq).reshape(B, num_heads, hd, N)
    k = conv1x1(xf, wk, bk).reshape(B, num_heads, hd, N)
    v = conv1x1(xf, wv, bv).reshape(B, num_heads, hd, N)

    qp = jnp.transpose(q, (0, 1, 3, 2))              # (B, h, N, hd)
    scores = jnp.matmul(qp, k) / (hd ** 0.5)         # (B, h, N, N)
    prob = jax.nn.softmax(scores, axis=-1)
    vp = jnp.transpose(v, (0, 1, 3, 2))              # (B, h, N, hd)
    ao = jnp.matmul(prob, vp)                        # (B, h, N, hd)
    ao = jnp.transpose(ao, (0, 1, 3, 2)).reshape(B, C, N)
    out = conv1x1(ao, wo, bo).reshape(B, C, H, W)
    return x_nchw + out


def init_params(key, in_channels):
    C = in_channels
    ks = jax.random.split(key, 8)
    scale = 1.0 / (C ** 0.5)   # ~= PyTorch Conv2d default uniform bound scale
    wq = jax.random.normal(ks[0], (C, C), jnp.float32) * scale
    bq = jax.random.normal(ks[1], (C,), jnp.float32) * scale
    wk = jax.random.normal(ks[2], (C, C), jnp.float32) * scale
    bk = jax.random.normal(ks[3], (C,), jnp.float32) * scale
    wv = jax.random.normal(ks[4], (C, C), jnp.float32) * scale
    bv = jax.random.normal(ks[5], (C,), jnp.float32) * scale
    wo = jax.random.normal(ks[6], (C, C), jnp.float32) * scale
    bo = jax.random.normal(ks[7], (C,), jnp.float32) * scale
    return (wq, bq, wk, bk, wv, bv, wo, bo)


if __name__ == "__main__":
    B, C, H, W = 2, 64, 16, 16
    num_heads = 4

    key = jax.random.PRNGKey(0)
    k_x, k_p = jax.random.split(key)
    x = jax.random.normal(k_x, (B, C, H, W), jnp.float32)
    params = init_params(k_p, C)

    # Small tiles so the test exercises the merged (batch*q_tiles, kv_tiles)
    # grid and the multi-step online-softmax accumulation path (N=256 -> 2x2).
    out = self_attention_pallas(x, params, num_heads, q_tile=128, kv_tile=128)
    out = jax.block_until_ready(out)

    ref = jax.block_until_ready(_reference(x, params, num_heads))
    assert out.shape == (B, C, H, W)
    # Tolerance accounts for bf16 matmul operands (f32 accumulation, f32 softmax).
    assert jnp.allclose(out, ref, rtol=5e-2, atol=5e-2), "mismatch vs reference"

    print("KERNEL_OK")
</pallas_src>

<mosaic_0001>
module attributes {stable_mosaic.version = 11 : i64} {
  func.func @_qkv_proj_kernel(%arg0: i32, %arg1: memref<512x64xbf16, #tpu.memory_space<vmem>>, %arg2: memref<64x192xbf16, #tpu.memory_space<vmem>>, %arg3: memref<1x192xf32, #tpu.memory_space<vmem>>, %arg4: memref<512x192xbf16, #tpu.memory_space<vmem>>) attributes {dimension_semantics = [#tpu.dimension_semantics<parallel>], iteration_bounds = array<i64: 1>, scalar_prefetch = 0 : i64, scratch_operands = 0 : i64, tpu.core_type = #tpu.core_type<tc>, window_params = [{transform_indices = @transform_0, window_bounds = array<i64: 512, 64>}, {pipeline_mode = #tpu.pipeline_mode<synchronous>, transform_indices = @transform_1, window_bounds = array<i64: 64, 192>}, {pipeline_mode = #tpu.pipeline_mode<synchronous>, transform_indices = @transform_2, window_bounds = array<i64: 1, 192>}, {transform_indices = @transform_3, window_bounds = array<i64: 512, 192>}]} {
    %c0 = arith.constant 0 : index
    %c0_0 = arith.constant 0 : index
    %0 = vector.load %arg1[%c0, %c0_0] : memref<512x64xbf16, #tpu.memory_space<vmem>>, vector<512x64xbf16>
    %c0_1 = arith.constant 0 : index
    %c0_2 = arith.constant 0 : index
    %1 = vector.load %arg2[%c0_1, %c0_2] : memref<64x192xbf16, #tpu.memory_space<vmem>>, vector<64x192xbf16>
    %cst = arith.constant dense<0.000000e+00> : vector<512x192xf32>
    %2 = tpu.matmul %0, %1, %cst {dimension_numbers = #tpu.dot_dimension_numbers<[1], [0], [0], [1], [0, 0, 1, 1], [], []>} : vector<512x64xbf16>, vector<64x192xbf16>, vector<512x192xf32> -> vector<512x192xf32>
    %c0_3 = arith.constant 0 : index
    %c0_4 = arith.constant 0 : index
    %3 = vector.load %arg3[%c0_3, %c0_4] : memref<1x192xf32, #tpu.memory_space<vmem>>, vector<1x192xf32>
    %4 = vector.broadcast %3 : vector<1x192xf32> to vector<512x192xf32>
    %5 = arith.addf %2, %4 : vector<512x192xf32>
    %6 = arith.truncf %5 : vector<512x192xf32> to vector<512x192xbf16>
    %c0_5 = arith.constant 0 : index
    %c0_6 = arith.constant 0 : index
    %7 = vector.load %arg4[%c0_5, %c0_6] : memref<512x192xbf16, #tpu.memory_space<vmem>>, vector<512x192xbf16>
    tpu.vector_store %arg4[%c0_5, %c0_6], %6 {strides = array<i32>} : memref<512x192xbf16, #tpu.memory_space<vmem>>, vector<512x192xbf16>,
    return
  }
  func.func @transform_0(%arg0: i32) -> (i32, i32) {
    %c0_i32 = arith.constant 0 : i32
    %c0_i32_0 = arith.constant 0 : i32
    return %arg0, %c0_i32 : i32, i32
  }
  func.func @transform_1(%arg0: i32) -> (i32, i32) {
    %c0_i32 = arith.constant 0 : i32
    %c0_i32_0 = arith.constant 0 : i32
    %c0_i32_1 = arith.constant 0 : i32
    return %c0_i32, %c0_i32_0 : i32, i32
  }
  func.func @transform_2(%arg0: i32) -> (i32, i32) {
    %c0_i32 = arith.constant 0 : i32
    %c0_i32_0 = arith.constant 0 : i32
    %c0_i32_1 = arith.constant 0 : i32
    return %c0_i32, %c0_i32_0 : i32, i32
  }
  func.func @transform_3(%arg0: i32) -> (i32, i32) {
    %c0_i32 = arith.constant 0 : i32
    %c0_i32_0 = arith.constant 0 : i32
    return %arg0, %c0_i32 : i32, i32
  }
}

</mosaic_0001>

<llo_original>
// kernel: tpu_custom_call.1
$region0: #{tpu_custom_call.1}
  #allocation0 [shape = 'u32[]', space=smem, size = 0x4, offset = 0x4, fixed_abs, tag = 'smem constant byte address 0x4 - core index']
  #allocation1 [shape = 'u32[72,128]{1,0:T(1,128)}', space=vmem, size = 0x9000, scoped, tag = 'internal scratch']
  %s0 = inlined_call_operand.vmem [shape: bf16[512,64], index: 0, kind: input, shape index: {}]
  %s1 = inlined_call_operand.vmem [shape: bf16[64,192], index: 1, kind: input, shape index: {}]
  %s2 = inlined_call_operand.vmem [shape: f32[1,192], index: 2, kind: input, shape index: {}]
  %s3 = inlined_call_operand.vmem [shape: bf16[512,192], index: 3, kind: output, shape index: {}]
  %s4 = sld [smem:[#allocation0]]
  $region22: #{tpu_custom_call.1} parent=0
    _
  %s6 = ssub.s32 1, %s4
  %s7 = scalar_select 0, %s6, %s4
  // Predicated region
  $region2: #{tpu_custom_call.1} parent=0 // pred_check
    _
  $region3: #{tpu_custom_call.1} parent=0 // pred_check_branch
    %9 = sbr.rel (0) target = $region5
  $region4: #{tpu_custom_call.1} parent=0 // pred_region
    _
  $region5: #{tpu_custom_call.1} parent=0 // pred_fallthru
    _
  // Predicated region
  $region6: #{tpu_custom_call.1} parent=0 // pred_check
    _
  $region7: #{tpu_custom_call.1} parent=0 // pred_check_branch
    %11 = sbr.rel (0) target = $region9
  $region8: #{tpu_custom_call.1} parent=0 // pred_region
    _
  $region9: #{tpu_custom_call.1} parent=0 // pred_fallthru
    _
  // Predicated region
  $region10: #{tpu_custom_call.1} parent=0 // pred_check
    _
  $region11: #{tpu_custom_call.1} parent=0 // pred_check_branch
    %13 = sbr.rel (0) target = $region13
  $region12: #{tpu_custom_call.1} parent=0 // pred_region
    _
  $region13: #{tpu_custom_call.1} parent=0 // pred_fallthru
    _
  %v15 = vld [vmem:[%s0] sm:$0xf]
  %v16 = vld [vmem:[%s0 + $0x4] sm:$0xf]
  %v17 = vld [vmem:[%s0 + $0x8] sm:$0xf]
  %v18 = vld [vmem:[%s0 + $0xc] sm:$0xf]
  %v19 = vld [vmem:[%s0 + $0x10] sm:$0xf]
  %v20 = vld [vmem:[%s0 + $0x14] sm:$0xf]
  %v21 = vld [vmem:[%s0 + $0x18] sm:$0xf]
  %v22 = vld [vmem:[%s0 + $0x1c] sm:$0xf]
  %v23 = vld [vmem:[%s0 + $0x20] sm:$0xf]
  %v24 = vld [vmem:[%s0 + $0x24] sm:$0xf]
  %v25 = vld [vmem:[%s0 + $0x28] sm:$0xf]
  %v26 = vld [vmem:[%s0 + $0x2c] sm:$0xf]
  %v27 = vld [vmem:[%s0 + $0x30] sm:$0xf]
  %v28 = vld [vmem:[%s0 + $0x34] sm:$0xf]
  %v29 = vld [vmem:[%s0 + $0x38] sm:$0xf]
  %v30 = vld [vmem:[%s0 + $0x3c] sm:$0xf]
  %v31 = vld [vmem:[%s0 + $0x40] sm:$0xf]
  %v32 = vld [vmem:[%s0 + $0x44] sm:$0xf]
  %v33 = vld [vmem:[%s0 + $0x48] sm:$0xf]
  %v34 = vld [vmem:[%s0 + $0x4c] sm:$0xf]
  %v35 = vld [vmem:[%s0 + $0x50] sm:$0xf]
  %v36 = vld [vmem:[%s0 + $0x54] sm:$0xf]
  %v37 = vld [vmem:[%s0 + $0x58] sm:$0xf]
  %v38 = vld [vmem:[%s0 + $0x5c] sm:$0xf]
  %v39 = vld [vmem:[%s0 + $0x60] sm:$0xf]
  %v40 = vld [vmem:[%s0 + $0x64] sm:$0xf]
  %v41 = vld [vmem:[%s0 + $0x68] sm:$0xf]
  %v42 = vld [vmem:[%s0 + $0x6c] sm:$0xf]
  %v43 = vld [vmem:[%s0 + $0x70] sm:$0xf]
  %v44 = vld [vmem:[%s0 + $0x74] sm:$0xf]
  %v45 = vld [vmem:[%s0 + $0x78] sm:$0xf]
  %v46 = vld [vmem:[%s0 + $0x7c] sm:$0xf]
  %v47 = vld [vmem:[%s0 + $0x80] sm:$0xf]
  %v48 = vld [vmem:[%s0 + $0x84] sm:$0xf]
  %v49 = vld [vmem:[%s0 + $0x88] sm:$0xf]
  %v50 = vld [vmem:[%s0 + $0x8c] sm:$0xf]
  %v51 = vld [vmem:[%s0 + $0x90] sm:$0xf]
  %v52 = vld [vmem:[%s0 + $0x94] sm:$0xf]
  %v53 = vld [vmem:[%s0 + $0x98] sm:$0xf]
  %v54 = vld [vmem:[%s0 + $0x9c] sm:$0xf]
  %v55 = vld [vmem:[%s0 + $0xa0] sm:$0xf]
  %v56 = vld [vmem:[%s0 + $0xa4] sm:$0xf]
  %v57 = vld [vmem:[%s0 + $0xa8] sm:$0xf]
  %v58 = vld [vmem:[%s0 + $0xac] sm:$0xf]
  %v59 = vld [vmem:[%s0 + $0xb0] sm:$0xf]
  %v60 = vld [vmem:[%s0 + $0xb4] sm:$0xf]
  %v61 = vld [vmem:[%s0 + $0xb8] sm:$0xf]
  %v62 = vld [vmem:[%s0 + $0xbc] sm:$0xf]
  %v63 = vld [vmem:[%s0 + $0xc0] sm:$0xf]
  %v64 = vld [vmem:[%s0 + $0xc4] sm:$0xf]
  %v65 = vld [vmem:[%s0 + $0xc8] sm:$0xf]
  %v66 = vld [vmem:[%s0 + $0xcc] sm:$0xf]
  %v67 = vld [vmem:[%s0 + $0xd0] sm:$0xf]
  %v68 = vld [vmem:[%s0 + $0xd4] sm:$0xf]
  %v69 = vld [vmem:[%s0 + $0xd8] sm:$0xf]
  %v70 = vld [vmem:[%s0 + $0xdc] sm:$0xf]
  %v71 = vld [vmem:[%s0 + $0xe0] sm:$0xf]
  %v72 = vld [vmem:[%s0 + $0xe4] sm:$0xf]
  %v73 = vld [vmem:[%s0 + $0xe8] sm:$0xf]
  %v74 = vld [vmem:[%s0 + $0xec] sm:$0xf]
  %v75 = vld [vmem:[%s0 + $0xf0] sm:$0xf]
  %v76 = vld [vmem:[%s0 + $0xf4] sm:$0xf]
  %v77 = vld [vmem:[%s0 + $0xf8] sm:$0xf]
  %v78 = vld [vmem:[%s0 + $0xfc] sm:$0xf]
  %v79 = vld [vmem:[%s1] sm:$0xff]
  %v80 = vld [vmem:[%s1 + $0x8] sm:$0xff]
  %v81 = vld [vmem:[%s1 + $0x10] sm:$0xff]
  %v82 = vld [vmem:[%s1 + $0x18] sm:$0xff]
  %v83 = vld [vmem:[%s1 + $0x20] sm:$0xff]
  %v84 = vld [vmem:[%s1 + $0x28] sm:$0xff]
  %v85 = vld [vmem:[%s1 + $0x30] sm:$0xff]
  %v86 = vld [vmem:[%s1 + $0x38] sm:$0xff]
  %v87 = vld [vmem:[%s2] sm:$0x3]
  %v89 = vperm.slane %v87, 0
  %v90 = vperm.slane %v87, 1
  %v157 = vunpack.c.l.b16 %v15
  %v158 = vunpack.c.l.b16 %v16
  %v159 = vunpack.c.l.b16 %v17
  %v160 = vunpack.c.l.b16 %v18
  %v161 = vunpack.c.l.b16 %v19
  %v162 = vunpack.c.l.b16 %v20
  %v163 = vunpack.c.l.b16 %v21
  %v164 = vunpack.c.l.b16 %v22
  %v165 = vunpack.c.l.b16 %v23
  %v166 = vunpack.c.l.b16 %v24
  %v167 = vunpack.c.l.b16 %v25
  %v168 = vunpack.c.l.b16 %v26
  %v169 = vunpack.c.l.b16 %v27
  %v170 = vunpack.c.l.b16 %v28
  %v171 = vunpack.c.l.b16 %v29
  %v172 = vunpack.c.l.b16 %v30
  %v173 = vunpack.c.l.b16 %v31
  %v174 = vunpack.c.l.b16 %v32
  %v175 = vunpack.c.l.b16 %v33
  %v176 = vunpack.c.l.b16 %v34
  %v177 = vunpack.c.l.b16 %v35
  %v178 = vunpack.c.l.b16 %v36
  %v179 = vunpack.c.l.b16 %v37
  %v180 = vunpack.c.l.b16 %v38
  %v181 = vunpack.c.l.b16 %v39
  %v182 = vunpack.c.l.b16 %v40
  %v183 = vunpack.c.l.b16 %v41
  %v184 = vunpack.c.l.b16 %v42
  %v185 = vunpack.c.l.b16 %v43
  %v186 = vunpack.c.l.b16 %v44
  %v187 = vunpack.c.l.b16 %v45
  %v188 = vunpack.c.l.b16 %v46
  %v189 = vunpack.c.l.b16 %v47
  %v190 = vunpack.c.l.b16 %v48
  %v191 = vunpack.c.l.b16 %v49
  %v192 = vunpack.c.l.b16 %v50
  %v193 = vunpack.c.l.b16 %v51
  %v194 = vunpack.c.l.b16 %v52
  %v195 = vunpack.c.l.b16 %v53
  %v196 = vunpack.c.l.b16 %v54
  %v197 = vunpack.c.l.b16 %v55
  %v198 = vunpack.c.l.b16 %v56
  %v199 = vunpack.c.l.b16 %v57
  %v200 = vunpack.c.l.b16 %v58
  %v201 = vunpack.c.l.b16 %v59
  %v202 = vunpack.c.l.b16 %v60
  %v203 = vunpack.c.l.b16 %v61
  %v204 = vunpack.c.l.b16 %v62
  %v205 = vunpack.c.l.b16 %v63
  %v206 = vunpack.c.l.b16 %v64
  %v207 = vunpack.c.l.b16 %v65
  %v208 = vunpack.c.l.b16 %v66
  %v209 = vunpack.c.l.b16 %v67
  %v210 = vunpack.c.l.b16 %v68
  %v211 = vunpack.c.l.b16 %v69
  %v212 = vunpack.c.l.b16 %v70
  %v213 = vunpack.c.l.b16 %v71
  %v214 = vunpack.c.l.b16 %v72
  %v215 = vunpack.c.l.b16 %v73
  %v216 = vunpack.c.l.b16 %v74
  %v217 = vunpack.c.l.b16 %v75
  %v218 = vunpack.c.l.b16 %v76
  %v219 = vunpack.c.l.b16 %v77
  %v220 = vunpack.c.l.b16 %v78
  %v221 = vpack.c.b16 %v158, %v157
  %v222 = vpack.c.b16 %v160, %v159
  %v223 = vpack.c.b16 %v162, %v161
  %v224 = vpack.c.b16 %v164, %v163
  %v225 = vpack.c.b16 %v166, %v165
  %v226 = vpack.c.b16 %v168, %v167
  %v227 = vpack.c.b16 %v170, %v169
  %v228 = vpack.c.b16 %v172, %v171
  %v229 = vpack.c.b16 %v174, %v173
  %v230 = vpack.c.b16 %v176, %v175
  %v231 = vpack.c.b16 %v178, %v177
  %v232 = vpack.c.b16 %v180, %v179
  %v233 = vpack.c.b16 %v182, %v181
  %v234 = vpack.c.b16 %v184, %v183
  %v235 = vpack.c.b16 %v186, %v185
  %v236 = vpack.c.b16 %v188, %v187
  %v237 = vpack.c.b16 %v190, %v189
  %v238 = vpack.c.b16 %v192, %v191
  %v239 = vpack.c.b16 %v194, %v193
  %v240 = vpack.c.b16 %v196, %v195
  %v241 = vpack.c.b16 %v198, %v197
  %v242 = vpack.c.b16 %v200, %v199
  %v243 = vpack.c.b16 %v202, %v201
  %v244 = vpack.c.b16 %v204, %v203
  %v245 = vpack.c.b16 %v206, %v205
  %v246 = vpack.c.b16 %v208, %v207
  %v247 = vpack.c.b16 %v210, %v209
  %v248 = vpack.c.b16 %v212, %v211
  %v249 = vpack.c.b16 %v214, %v213
  %v250 = vpack.c.b16 %v216, %v215
  %v251 = vpack.c.b16 %v218, %v217
  %v252 = vpack.c.b16 %v220, %v219
  %v261 = vunpack.c.l.b16 %v79
  %v262 = vunpack.c.h.b16 %v79
  %v263 = vunpack.c.l.b16 %v80
  %v264 = vunpack.c.h.b16 %v80
  %v265 = vunpack.c.l.b16 %v81
  %v266 = vunpack.c.h.b16 %v81
  %v267 = vunpack.c.l.b16 %v82
  %v268 = vunpack.c.h.b16 %v82
  %v269 = vunpack.c.l.b16 %v83
  %v270 = vunpack.c.h.b16 %v83
  %v271 = vunpack.c.l.b16 %v84
  %v272 = vunpack.c.h.b16 %v84
  %v273 = vunpack.c.l.b16 %v85
  %v274 = vunpack.c.h.b16 %v85
  %v275 = vunpack.c.l.b16 %v86
  %v276 = vunpack.c.h.b16 %v86
  %v277 = vpack.c.b16 %v263, %v261
  %v278 = vpack.c.b16 %v264, %v262
  %v279 = vpack.c.b16 %v267, %v265
  %v280 = vpack.c.b16 %v268, %v266
  %v281 = vpack.c.b16 %v271, %v269
  %v282 = vpack.c.b16 %v272, %v270
  %v283 = vpack.c.b16 %v275, %v273
  %v284 = vpack.c.b16 %v276, %v274
  %vm293 = vcmask 523264
  %v295 = vsel %vm293, %v221, 0
  %v298 = vsel %vm293, %v222, 0
  %v301 = vsel %vm293, %v223, 0
  %v304 = vsel %vm293, %v224, 0
  %v307 = vsel %vm293, %v225, 0
  %v310 = vsel %vm293, %v226, 0
  %v313 = vsel %vm293, %v227, 0
  %v316 = vsel %vm293, %v228, 0
  %v319 = vsel %vm293, %v229, 0
  %v322 = vsel %vm293, %v230, 0
  %v325 = vsel %vm293, %v231, 0
  %v328 = vsel %vm293, %v232, 0
  %v331 = vsel %vm293, %v233, 0
  %v334 = vsel %vm293, %v234, 0
  %v337 = vsel %vm293, %v235, 0
  %v340 = vsel %vm293, %v236, 0
  %v343 = vsel %vm293, %v237, 0
  %v346 = vsel %vm293, %v238, 0
  %v349 = vsel %vm293, %v239, 0
  %v352 = vsel %vm293, %v240, 0
  %v355 = vsel %vm293, %v241, 0
  %v358 = vsel %vm293, %v242, 0
  %v361 = vsel %vm293, %v243, 0
  %v364 = vsel %vm293, %v244, 0
  %v367 = vsel %vm293, %v245, 0
  %v370 = vsel %vm293, %v246, 0
  %v373 = vsel %vm293, %v247, 0
  %v376 = vsel %vm293, %v248, 0
  %v379 = vsel %vm293, %v249, 0
  %v382 = vsel %vm293, %v250, 0
  %v385 = vsel %vm293, %v251, 0
  %v388 = vsel %vm293, %v252, 0
  %390 = vmatpush.bf16.msra.mxu0 0
  %391 = vmatpush.bf16.msra.mxu0 0
  %392 = vmatpush.bf16.msra.mxu0 0
  %393 = vmatpush.bf16.msra.mxu0 0
  %394 = vmatpush.bf16.msra.mxu0 %v283
  %395 = vmatpush.bf16.msra.mxu0 %v281
  %396 = vmatpush.bf16.msra.mxu0 %v279
  %397 = vmatpush.bf16.msra.mxu0 %v277
  %398 = vmatmul.bf16.gmra.mxu0 %v295
  %v399 = vpop.f32.mrf.mxu0
  %v400 = vadd.f32 %v89, %v399
  %v401 = vpop.f32.mrf.mxu0
  %v402 = vadd.f32 %v89, %v401
  %403 = vmatmul.bf16.gmra.mxu0 %v298
  %v404 = vpop.f32.mrf.mxu0
  %v405 = vadd.f32 %v89, %v404
  %v406 = vpop.f32.mrf.mxu0
  %v407 = vadd.f32 %v89, %v406
  %408 = vmatmul.bf16.gmra.mxu0 %v301
  %v409 = vpop.f32.mrf.mxu0
  %v410 = vadd.f32 %v89, %v409
  %v411 = vpop.f32.mrf.mxu0
  %v412 = vadd.f32 %v89, %v411
  %413 = vmatmul.bf16.gmra.mxu0 %v304
  %v414 = vpop.f32.mrf.mxu0
  %v415 = vadd.f32 %v89, %v414
  %v416 = vpop.f32.mrf.mxu0
  %v417 = vadd.f32 %v89, %v416
  %418 = vmatmul.bf16.gmra.mxu0 %v307
  %v419 = vpop.f32.mrf.mxu0
  %v420 = vadd.f32 %v89, %v419
  %v421 = vpop.f32.mrf.mxu0
  %v422 = vadd.f32 %v89, %v421
  %423 = vmatmul.bf16.gmra.mxu0 %v310
  %v424 = vpop.f32.mrf.mxu0
  %v425 = vadd.f32 %v89, %v424
  %v426 = vpop.f32.mrf.mxu0
  %v427 = vadd.f32 %v89, %v426
  %428 = vmatmul.bf16.gmra.mxu0 %v313
  %v429 = vpop.f32.mrf.mxu0
  %v430 = vadd.f32 %v89, %v429
  %v431 = vpop.f32.mrf.mxu0
  %v432 = vadd.f32 %v89, %v431
  %433 = vmatmul.bf16.gmra.mxu0 %v316
  %v434 = vpop.f32.mrf.mxu0
  %v435 = vadd.f32 %v89, %v434
  %v436 = vpop.f32.mrf.mxu0
  %v437 = vadd.f32 %v89, %v436
  %438 = vmatmul.bf16.gmra.mxu0 %v319
  %v439 = vpop.f32.mrf.mxu0
  %v440 = vadd.f32 %v89, %v439
  %v441 = vpop.f32.mrf.mxu0
  %v442 = vadd.f32 %v89, %v441
  %443 = vmatmul.bf16.gmra.mxu0 %v322
  %v444 = vpop.f32.mrf.mxu0
  %v445 = vadd.f32 %v89, %v444
  %v446 = vpop.f32.mrf.mxu0
  %v447 = vadd.f32 %v89, %v446
  %448 = vmatmul.bf16.gmra.mxu0 %v325
  %v449 = vpop.f32.mrf.mxu0
  %v450 = vadd.f32 %v89, %v449
  %v451 = vpop.f32.mrf.mxu0
  %v452 = vadd.f32 %v89, %v451
  %453 = vmatmul.bf16.gmra.mxu0 %v328
  %v454 = vpop.f32.mrf.mxu0
  %v455 = vadd.f32 %v89, %v454
  %v456 = vpop.f32.mrf.mxu0
  %v457 = vadd.f32 %v89, %v456
  %458 = vmatmul.bf16.gmra.mxu0 %v331
  %v459 = vpop.f32.mrf.mxu0
  %v460 = vadd.f32 %v89, %v459
  %v461 = vpop.f32.mrf.mxu0
  %v462 = vadd.f32 %v89, %v461
  %463 = vmatmul.bf16.gmra.mxu0 %v334
  %v464 = vpop.f32.mrf.mxu0
  %v465 = vadd.f32 %v89, %v464
  %v466 = vpop.f32.mrf.mxu0
  %v467 = vadd.f32 %v89, %v466
  %468 = vmatmul.bf16.gmra.mxu0 %v337
  %v469 = vpop.f32.mrf.mxu0
  %v470 = vadd.f32 %v89, %v469
  %v471 = vpop.f32.mrf.mxu0
  %v472 = vadd.f32 %v89, %v471
  %473 = vmatmul.bf16.gmra.mxu0 %v340
  %v474 = vpop.f32.mrf.mxu0
  %v475 = vadd.f32 %v89, %v474
  %v476 = vpop.f32.mrf.mxu0
  %v477 = vadd.f32 %v89, %v476
  %478 = vmatmul.bf16.gmra.mxu0 %v343
  %v479 = vpop.f32.mrf.mxu0
  %v480 = vadd.f32 %v89, %v479
  %v481 = vpop.f32.mrf.mxu0
  %v482 = vadd.f32 %v89, %v481
  %483 = vmatmul.bf16.gmra.mxu0 %v346
  %v484 = vpop.f32.mrf.mxu0
  %v485 = vadd.f32 %v89, %v484
  %v486 = vpop.f32.mrf.mxu0
  %v487 = vadd.f32 %v89, %v486
  %488 = vmatmul.bf16.gmra.mxu0 %v349
  %v489 = vpop.f32.mrf.mxu0
  %v490 = vadd.f32 %v89, %v489
  %v491 = vpop.f32.mrf.mxu0
  %v492 = vadd.f32 %v89, %v491
  %493 = vmatmul.bf16.gmra.mxu0 %v352
  %v494 = vpop.f32.mrf.mxu0
  %v495 = vadd.f32 %v89, %v494
  %v496 = vpop.f32.mrf.mxu0
  %v497 = vadd.f32 %v89, %v496
  %498 = vmatmul.bf16.gmra.mxu0 %v355
  %v499 = vpop.f32.mrf.mxu0
  %v500 = vadd.f32 %v89, %v499
  %v501 = vpop.f32.mrf.mxu0
  %v502 = vadd.f32 %v89, %v501
  %503 = vmatmul.bf16.gmra.mxu0 %v358
  %v504 = vpop.f32.mrf.mxu0
  %v505 = vadd.f32 %v89, %v504
  %v506 = vpop.f32.mrf.mxu0
  %v507 = vadd.f32 %v89, %v506
  %508 = vmatmul.bf16.gmra.mxu0 %v361
  %v509 = vpop.f32.mrf.mxu0
  %v510 = vadd.f32 %v89, %v509
  %v511 = vpop.f32.mrf.mxu0
  %v512 = vadd.f32 %v89, %v511
  %513 = vmatmul.bf16.gmra.mxu0 %v364
  %v514 = vpop.f32.mrf.mxu0
  %v515 = vadd.f32 %v89, %v514
  %v516 = vpop.f32.mrf.mxu0
  %v517 = vadd.f32 %v89, %v516
  %518 = vmatmul.bf16.gmra.mxu0 %v367
  %v519 = vpop.f32.mrf.mxu0
  %v520 = vadd.f32 %v89, %v519
  %v521 = vpop.f32.mrf.mxu0
  %v522 = vadd.f32 %v89, %v521
  %523 = vmatmul.bf16.gmra.mxu0 %v370
  %v524 = vpop.f32.mrf.mxu0
  %v525 = vadd.f32 %v89, %v524
  %v526 = vpop.f32.mrf.mxu0
  %v527 = vadd.f32 %v89, %v526
  %528 = vmatmul.bf16.gmra.mxu0 %v373
  %v529 = vpop.f32.mrf.mxu0
  %v530 = vadd.f32 %v89, %v529
  %v531 = vpop.f32.mrf.mxu0
  %v532 = vadd.f32 %v89, %v531
  %533 = vmatmul.bf16.gmra.mxu0 %v376
  %v534 = vpop.f32.mrf.mxu0
  %v535 = vadd.f32 %v89, %v534
  %v536 = vpop.f32.mrf.mxu0
  %v537 = vadd.f32 %v89, %v536
  %538 = vmatmul.bf16.gmra.mxu0 %v379
  %v539 = vpop.f32.mrf.mxu0
  %v540 = vadd.f32 %v89, %v539
  %v541 = vpop.f32.mrf.mxu0
  %v542 = vadd.f32 %v89, %v541
  %543 = vmatmul.bf16.gmra.mxu0 %v382
  %v544 = vpop.f32.mrf.mxu0
  %v545 = vadd.f32 %v89, %v544
  %v546 = vpop.f32.mrf.mxu0
  %v547 = vadd.f32 %v89, %v546
  %548 = vmatmul.bf16.gmra.mxu0 %v385
  %v549 = vpop.f32.mrf.mxu0
  %v550 = vadd.f32 %v89, %v549
  %v551 = vpop.f32.mrf.mxu0
  %v552 = vadd.f32 %v89, %v551
  %553 = vmatmul.bf16.gmra.mxu0 %v388
  %v554 = vpop.f32.mrf.mxu0
  %v555 = vadd.f32 %v89, %v554
  %v556 = vpop.f32.mrf.mxu0
  %v557 = vadd.f32 %v89, %v556
  %558 = vdwg.mxu0
  %559 = vmatpush.bf16.msra.mxu0 0
  %560 = vmatpush.bf16.msra.mxu0 0
  %561 = vmatpush.bf16.msra.mxu0 0
  %562 = vmatpush.bf16.msra.mxu0 0
  %563 = vmatpush.bf16.msra.mxu0 %v284
  %564 = vmatpush.bf16.msra.mxu0 %v282
  %565 = vmatpush.bf16.msra.mxu0 %v280
  %566 = vmatpush.bf16.msra.mxu0 %v278
  %567 = vmatmul.bf16.gmra.mxu0 %v295
  %v568 = vpop.f32.mrf.mxu0
  %v569 = vadd.f32 %v90, %v568
  %v570 = vpop.f32.mrf.mxu0
  %v571 = vadd.f32 %v90, %v570
  %572 = vmatmul.bf16.gmra.mxu0 %v298
  %v573 = vpop.f32.mrf.mxu0
  %v574 = vadd.f32 %v90, %v573
  %v575 = vpop.f32.mrf.mxu0
  %v576 = vadd.f32 %v90, %v575
  %577 = vmatmul.bf16.gmra.mxu0 %v301
  %v578 = vpop.f32.mrf.mxu0
  %v579 = vadd.f32 %v90, %v578
  %v580 = vpop.f32.mrf.mxu0
  %v581 = vadd.f32 %v90, %v580
  %582 = vmatmul.bf16.gmra.mxu0 %v304
  %v583 = vpop.f32.mrf.mxu0
  %v584 = vadd.f32 %v90, %v583
  %v585 = vpop.f32.mrf.mxu0
  %v586 = vadd.f32 %v90, %v585
  %587 = vmatmul.bf16.gmra.mxu0 %v307
  %v588 = vpop.f32.mrf.mxu0
  %v589 = vadd.f32 %v90, %v588
  %v590 = vpop.f32.mrf.mxu0
  %v591 = vadd.f32 %v90, %v590
  %592 = vmatmul.bf16.gmra.mxu0 %v310
  %v593 = vpop.f32.mrf.mxu0
  %v594 = vadd.f32 %v90, %v593
  %v595 = vpop.f32.mrf.mxu0
  %v596 = vadd.f32 %v90, %v595
  %597 = vmatmul.bf16.gmra.mxu0 %v313
  %v598 = vpop.f32.mrf.mxu0
  %v599 = vadd.f32 %v90, %v598
  %v600 = vpop.f32.mrf.mxu0
  %v601 = vadd.f32 %v90, %v600
  %602 = vmatmul.bf16.gmra.mxu0 %v316
  %v603 = vpop.f32.mrf.mxu0
  %v604 = vadd.f32 %v90, %v603
  %v605 = vpop.f32.mrf.mxu0
  %v606 = vadd.f32 %v90, %v605
  %607 = vmatmul.bf16.gmra.mxu0 %v319
  %v608 = vpop.f32.mrf.mxu0
  %v609 = vadd.f32 %v90, %v608
  %v610 = vpop.f32.mrf.mxu0
  %v611 = vadd.f32 %v90, %v610
  %612 = vmatmul.bf16.gmra.mxu0 %v322
  %v613 = vpop.f32.mrf.mxu0
  %v614 = vadd.f32 %v90, %v613
  %v615 = vpop.f32.mrf.mxu0
  %v616 = vadd.f32 %v90, %v615
  %617 = vmatmul.bf16.gmra.mxu0 %v325
  %v618 = vpop.f32.mrf.mxu0
  %v619 = vadd.f32 %v90, %v618
  %v620 = vpop.f32.mrf.mxu0
  %v621 = vadd.f32 %v90, %v620
  %622 = vmatmul.bf16.gmra.mxu0 %v328
  %v623 = vpop.f32.mrf.mxu0
  %v624 = vadd.f32 %v90, %v623
  %v625 = vpop.f32.mrf.mxu0
  %v626 = vadd.f32 %v90, %v625
  %627 = vmatmul.bf16.gmra.mxu0 %v331
  %v628 = vpop.f32.mrf.mxu0
  %v629 = vadd.f32 %v90, %v628
  %v630 = vpop.f32.mrf.mxu0
  %v631 = vadd.f32 %v90, %v630
  %632 = vmatmul.bf16.gmra.mxu0 %v334
  %v633 = vpop.f32.mrf.mxu0
  %v634 = vadd.f32 %v90, %v633
  %v635 = vpop.f32.mrf.mxu0
  %v636 = vadd.f32 %v90, %v635
  %637 = vmatmul.bf16.gmra.mxu0 %v337
  %v638 = vpop.f32.mrf.mxu0
  %v639 = vadd.f32 %v90, %v638
  %v640 = vpop.f32.mrf.mxu0
  %v641 = vadd.f32 %v90, %v640
  %642 = vmatmul.bf16.gmra.mxu0 %v340
  %v643 = vpop.f32.mrf.mxu0
  %v644 = vadd.f32 %v90, %v643
  %v645 = vpop.f32.mrf.mxu0
  %v646 = vadd.f32 %v90, %v645
  %647 = vmatmul.bf16.gmra.mxu0 %v343
  %v648 = vpop.f32.mrf.mxu0
  %v649 = vadd.f32 %v90, %v648
  %v650 = vpop.f32.mrf.mxu0
  %v651 = vadd.f32 %v90, %v650
  %652 = vmatmul.bf16.gmra.mxu0 %v346
  %v653 = vpop.f32.mrf.mxu0
  %v654 = vadd.f32 %v90, %v653
  %v655 = vpop.f32.mrf.mxu0
  %v656 = vadd.f32 %v90, %v655
  %657 = vmatmul.bf16.gmra.mxu0 %v349
  %v658 = vpop.f32.mrf.mxu0
  %v659 = vadd.f32 %v90, %v658
  %v660 = vpop.f32.mrf.mxu0
  %v661 = vadd.f32 %v90, %v660
  %662 = vmatmul.bf16.gmra.mxu0 %v352
  %v663 = vpop.f32.mrf.mxu0
  %v664 = vadd.f32 %v90, %v663
  %v665 = vpop.f32.mrf.mxu0
  %v666 = vadd.f32 %v90, %v665
  %667 = vmatmul.bf16.gmra.mxu0 %v355
  %v668 = vpop.f32.mrf.mxu0
  %v669 = vadd.f32 %v90, %v668
  %v670 = vpop.f32.mrf.mxu0
  %v671 = vadd.f32 %v90, %v670
  %672 = vmatmul.bf16.gmra.mxu0 %v358
  %v673 = vpop.f32.mrf.mxu0
  %v674 = vadd.f32 %v90, %v673
  %v675 = vpop.f32.mrf.mxu0
  %v676 = vadd.f32 %v90, %v675
  %677 = vmatmul.bf16.gmra.mxu0 %v361
  %v678 = vpop.f32.mrf.mxu0
  %v679 = vadd.f32 %v90, %v678
  %v680 = vpop.f32.mrf.mxu0
  %v681 = vadd.f32 %v90, %v680
  %682 = vmatmul.bf16.gmra.mxu0 %v364
  %v683 = vpop.f32.mrf.mxu0
  %v684 = vadd.f32 %v90, %v683
  %v685 = vpop.f32.mrf.mxu0
  %v686 = vadd.f32 %v90, %v685
  %687 = vmatmul.bf16.gmra.mxu0 %v367
  %v688 = vpop.f32.mrf.mxu0
  %v689 = vadd.f32 %v90, %v688
  %v690 = vpop.f32.mrf.mxu0
  %v691 = vadd.f32 %v90, %v690
  %692 = vmatmul.bf16.gmra.mxu0 %v370
  %v693 = vpop.f32.mrf.mxu0
  %v694 = vadd.f32 %v90, %v693
  %v695 = vpop.f32.mrf.mxu0
  %v696 = vadd.f32 %v90, %v695
  %697 = vmatmul.bf16.gmra.mxu0 %v373
  %v698 = vpop.f32.mrf.mxu0
  %v699 = vadd.f32 %v90, %v698
  %v700 = vpop.f32.mrf.mxu0
  %v701 = vadd.f32 %v90, %v700
  %702 = vmatmul.bf16.gmra.mxu0 %v376
  %v703 = vpop.f32.mrf.mxu0
  %v704 = vadd.f32 %v90, %v703
  %v705 = vpop.f32.mrf.mxu0
  %v706 = vadd.f32 %v90, %v705
  %707 = vmatmul.bf16.gmra.mxu0 %v379
  %v708 = vpop.f32.mrf.mxu0
  %v709 = vadd.f32 %v90, %v708
  %v710 = vpop.f32.mrf.mxu0
  %v711 = vadd.f32 %v90, %v710
  %712 = vmatmul.bf16.gmra.mxu0 %v382
  %v713 = vpop.f32.mrf.mxu0
  %v714 = vadd.f32 %v90, %v713
  %v715 = vpop.f32.mrf.mxu0
  %v716 = vadd.f32 %v90, %v715
  %717 = vmatmul.bf16.gmra.mxu0 %v385
  %v718 = vpop.f32.mrf.mxu0
  %v719 = vadd.f32 %v90, %v718
  %v720 = vpop.f32.mrf.mxu0
  %v721 = vadd.f32 %v90, %v720
  %722 = vmatmul.bf16.gmra.mxu0 %v388
  %v723 = vpop.f32.mrf.mxu0
  %v724 = vadd.f32 %v90, %v723
  %v725 = vpop.f32.mrf.mxu0
  %v726 = vadd.f32 %v90, %v725
  %727 = vdwg.mxu0
  %v728 = vpack.c.bf16 %v569, %v400
  %v729 = vpack.c.bf16 %v571, %v402
  %v730 = vpack.c.bf16 %v574, %v405
  %v731 = vpack.c.bf16 %v576, %v407
  %v732 = vpack.c.bf16 %v579, %v410
  %v733 = vpack.c.bf16 %v581, %v412
  %v734 = vpack.c.bf16 %v584, %v415
  %v735 = vpack.c.bf16 %v586, %v417
  %v736 = vpack.c.bf16 %v589, %v420
  %v737 = vpack.c.bf16 %v591, %v422
  %v738 = vpack.c.bf16 %v594, %v425
  %v739 = vpack.c.bf16 %v596, %v427
  %v740 = vpack.c.bf16 %v599, %v430
  %v741 = vpack.c.bf16 %v601, %v432
  %v742 = vpack.c.bf16 %v604, %v435
  %v743 = vpack.c.bf16 %v606, %v437
  %v744 = vpack.c.bf16 %v609, %v440
  %v745 = vpack.c.bf16 %v611, %v442
  %v746 = vpack.c.bf16 %v614, %v445
  %v747 = vpack.c.bf16 %v616, %v447
  %v748 = vpack.c.bf16 %v619, %v450
  %v749 = vpack.c.bf16 %v621, %v452
  %v750 = vpack.c.bf16 %v624, %v455
  %v751 = vpack.c.bf16 %v626, %v457
  %v752 = vpack.c.bf16 %v629, %v460
  %v753 = vpack.c.bf16 %v631, %v462
  %v754 = vpack.c.bf16 %v634, %v465
  %v755 = vpack.c.bf16 %v636, %v467
  %v756 = vpack.c.bf16 %v639, %v470
  %v757 = vpack.c.bf16 %v641, %v472
  %v758 = vpack.c.bf16 %v644, %v475
  %v759 = vpack.c.bf16 %v646, %v477
  %v760 = vpack.c.bf16 %v649, %v480
  %v761 = vpack.c.bf16 %v651, %v482
  %v762 = vpack.c.bf16 %v654, %v485
  %v763 = vpack.c.bf16 %v656, %v487
  %v764 = vpack.c.bf16 %v659, %v490
  %v765 = vpack.c.bf16 %v661, %v492
  %v766 = vpack.c.bf16 %v664, %v495
  %v767 = vpack.c.bf16 %v666, %v497
  %v768 = vpack.c.bf16 %v669, %v500
  %v769 = vpack.c.bf16 %v671, %v502
  %v770 = vpack.c.bf16 %v674, %v505
  %v771 = vpack.c.bf16 %v676, %v507
  %v772 = vpack.c.bf16 %v679, %v510
  %v773 = vpack.c.bf16 %v681, %v512
  %v774 = vpack.c.bf16 %v684, %v515
  %v775 = vpack.c.bf16 %v686, %v517
  %v776 = vpack.c.bf16 %v689, %v520
  %v777 = vpack.c.bf16 %v691, %v522
  %v778 = vpack.c.bf16 %v694, %v525
  %v779 = vpack.c.bf16 %v696, %v527
  %v780 = vpack.c.bf16 %v699, %v530
  %v781 = vpack.c.bf16 %v701, %v532
  %v782 = vpack.c.bf16 %v704, %v535
  %v783 = vpack.c.bf16 %v706, %v537
  %v784 = vpack.c.bf16 %v709, %v540
  %v785 = vpack.c.bf16 %v711, %v542
  %v786 = vpack.c.bf16 %v714, %v545
  %v787 = vpack.c.bf16 %v716, %v547
  %v788 = vpack.c.bf16 %v719, %v550
  %v789 = vpack.c.bf16 %v721, %v552
  %v790 = vpack.c.bf16 %v724, %v555
  %v791 = vpack.c.bf16 %v726, %v557
  %vm792 = vcmask 1043456
  %vm793 = vcmask 523268
  %vm794 = vmor %vm793, %vm792
  %795 = vst.msk [vmem:[%s3] sm:$0xff] %vm794, %v728
  %796 = vst.msk [vmem:[%s3 + $0x8] sm:$0xff] %vm794, %v729
  %797 = vst.msk [vmem:[%s3 + $0x10] sm:$0xff] %vm794, %v730
  %798 = vst.msk [vmem:[%s3 + $0x18] sm:$0xff] %vm794, %v731
  %799 = vst.msk [vmem:[%s3 + $0x20] sm:$0xff] %vm794, %v732
  %800 = vst.msk [vmem:[%s3 + $0x28] sm:$0xff] %vm794, %v733
  %801 = vst.msk [vmem:[%s3 + $0x30] sm:$0xff] %vm794, %v734
  %802 = vst.msk [vmem:[%s3 + $0x38] sm:$0xff] %vm794, %v735
  %803 = vst.msk [vmem:[%s3 + $0x40] sm:$0xff] %vm794, %v736
  %804 = vst.msk [vmem:[%s3 + $0x48] sm:$0xff] %vm794, %v737
  %805 = vst.msk [vmem:[%s3 + $0x50] sm:$0xff] %vm794, %v738
  %806 = vst.msk [vmem:[%s3 + $0x58] sm:$0xff] %vm794, %v739
  %807 = vst.msk [vmem:[%s3 + $0x60] sm:$0xff] %vm794, %v740
  %808 = vst.msk [vmem:[%s3 + $0x68] sm:$0xff] %vm794, %v741
  %809 = vst.msk [vmem:[%s3 + $0x70] sm:$0xff] %vm794, %v742
  %810 = vst.msk [vmem:[%s3 + $0x78] sm:$0xff] %vm794, %v743
  %811 = vst.msk [vmem:[%s3 + $0x80] sm:$0xff] %vm794, %v744
  %812 = vst.msk [vmem:[%s3 + $0x88] sm:$0xff] %vm794, %v745
  %813 = vst.msk [vmem:[%s3 + $0x90] sm:$0xff] %vm794, %v746
  %814 = vst.msk [vmem:[%s3 + $0x98] sm:$0xff] %vm794, %v747
  %815 = vst.msk [vmem:[%s3 + $0xa0] sm:$0xff] %vm794, %v748
  %816 = vst.msk [vmem:[%s3 + $0xa8] sm:$0xff] %vm794, %v749
  %817 = vst.msk [vmem:[%s3 + $0xb0] sm:$0xff] %vm794, %v750
  %818 = vst.msk [vmem:[%s3 + $0xb8] sm:$0xff] %vm794, %v751
  %819 = vst.msk [vmem:[%s3 + $0xc0] sm:$0xff] %vm794, %v752
  %820 = vst.msk [vmem:[%s3 + $0xc8] sm:$0xff] %vm794, %v753
  %821 = vst.msk [vmem:[%s3 + $0xd0] sm:$0xff] %vm794, %v754
  %822 = vst.msk [vmem:[%s3 + $0xd8] sm:$0xff] %vm794, %v755
  %823 = vst.msk [vmem:[%s3 + $0xe0] sm:$0xff] %vm794, %v756
  %824 = vst.msk [vmem:[%s3 + $0xe8] sm:$0xff] %vm794, %v757
  %825 = vst.msk [vmem:[%s3 + $0xf0] sm:$0xff] %vm794, %v758
  %826 = vst.msk [vmem:[%s3 + $0xf8] sm:$0xff] %vm794, %v759
  %827 = vst.msk [vmem:[%s3 + $0x100] sm:$0xff] %vm794, %v760
  %828 = vst.msk [vmem:[%s3 + $0x108] sm:$0xff] %vm794, %v761
  %829 = vst.msk [vmem:[%s3 + $0x110] sm:$0xff] %vm794, %v762
  %830 = vst.msk [vmem:[%s3 + $0x118] sm:$0xff] %vm794, %v763
  %831 = vst.msk [vmem:[%s3 + $0x120] sm:$0xff] %vm794, %v764
  %832 = vst.msk [vmem:[%s3 + $0x128] sm:$0xff] %vm794, %v765
  %833 = vst.msk [vmem:[%s3 + $0x130] sm:$0xff] %vm794, %v766
  %834 = vst.msk [vmem:[%s3 + $0x138] sm:$0xff] %vm794, %v767
  %835 = vst.msk [vmem:[%s3 + $0x140] sm:$0xff] %vm794, %v768
  %836 = vst.msk [vmem:[%s3 + $0x148] sm:$0xff] %vm794, %v769
  %837 = vst.msk [vmem:[%s3 + $0x150] sm:$0xff] %vm794, %v770
  %838 = vst.msk [vmem:[%s3 + $0x158] sm:$0xff] %vm794, %v771
  %839 = vst.msk [vmem:[%s3 + $0x160] sm:$0xff] %vm794, %v772
  %840 = vst.msk [vmem:[%s3 + $0x168] sm:$0xff] %vm794, %v773
  %841 = vst.msk [vmem:[%s3 + $0x170] sm:$0xff] %vm794, %v774
  %842 = vst.msk [vmem:[%s3 + $0x178] sm:$0xff] %vm794, %v775
  %843 = vst.msk [vmem:[%s3 + $0x180] sm:$0xff] %vm794, %v776
  %844 = vst.msk [vmem:[%s3 + $0x188] sm:$0xff] %vm794, %v777
  %845 = vst.msk [vmem:[%s3 + $0x190] sm:$0xff] %vm794, %v778
  %846 = vst.msk [vmem:[%s3 + $0x198] sm:$0xff] %vm794, %v779
  %847 = vst.msk [vmem:[%s3 + $0x1a0] sm:$0xff] %vm794, %v780
  %848 = vst.msk [vmem:[%s3 + $0x1a8] sm:$0xff] %vm794, %v781
  %849 = vst.msk [vmem:[%s3 + $0x1b0] sm:$0xff] %vm794, %v782
  %850 = vst.msk [vmem:[%s3 + $0x1b8] sm:$0xff] %vm794, %v783
  %851 = vst.msk [vmem:[%s3 + $0x1c0] sm:$0xff] %vm794, %v784
  %852 = vst.msk [vmem:[%s3 + $0x1c8] sm:$0xff] %vm794, %v785
  %853 = vst.msk [vmem:[%s3 + $0x1d0] sm:$0xff] %vm794, %v786
  %854 = vst.msk [vmem:[%s3 + $0x1d8] sm:$0xff] %vm794, %v787
  %855 = vst.msk [vmem:[%s3 + $0x1e0] sm:$0xff] %vm794, %v788
  %856 = vst.msk [vmem:[%s3 + $0x1e8] sm:$0xff] %vm794, %v789
  %857 = vst.msk [vmem:[%s3 + $0x1f0] sm:$0xff] %vm794, %v790
  %858 = vst.msk [vmem:[%s3 + $0x1f8] sm:$0xff] %vm794, %v791
  // Predicated region
  $region14: #{tpu_custom_call.1} parent=0 // pred_check
    _
  $region15: #{tpu_custom_call.1} parent=0 // pred_check_branch
    %860 = sbr.rel (0) target = $region17
  $region16: #{tpu_custom_call.1} parent=0 // pred_region
    _
  $region17: #{tpu_custom_call.1} parent=0 // pred_fallthru
    _
  // Predicated region
  $region18: #{tpu_custom_call.1} parent=0 // pred_check
    _
  $region19: #{tpu_custom_call.1} parent=0 // pred_check_branch
    %862 = sbr.rel (0) target = $region21
  $region20: #{tpu_custom_call.1} parent=0 // pred_region
    _
  $region21: #{tpu_custom_call.1} parent=0 // pred_fallthru
    _

</llo_original>
